<compile_context>
chip_gen: v7x
topology: tpu7x:2x2x1
jax: 0.10.0
libtpu: 0.0.40
codegen_flags: <defaults>
</compile_context>

<pallas_src>
import functools

import jax
import jax.numpy as jnp
from jax.experimental import pallas as pl
from jax.experimental.pallas import tpu as pltpu

# ---- logical model sizes (match the PyTorch module) -------------------------
EMBED_DIM = 8                      # pretrained_embeds.shape[1]
INPUT_SIZE = EMBED_DIM * 50        # = 400
HIDDEN_1 = 128
HIDDEN_2 = 64
N_CLASSES = 5                      # stand-in for len(LABEL_INDICES)

# ---- TPU-friendly padded sizes (lane-dense, (8,128)-aligned) -----------------
IN_PAD = 512                       # 400 -> 512
H1_PAD = 128                       # already aligned
H2_PAD = 128                       # 64  -> 128
C_PAD = 128                        # 5   -> 128

NEG_BIG = -1.0e30                  # baked into padded class-bias lanes


def _round_up(n, m):
    return (n + m - 1) // m * m


def _pick_tm():
    """Row-tile size: 128 on v2-v5 (4x128 MXU), 256 on v6e/v7x (2x256 MXU)."""
    try:
        kind = jax.devices()[0].device_kind.lower()
        if any(v in kind for v in ("v2", "v3", "v4", "v5")):
            return 128
    except Exception:
        pass
    return 256


# -----------------------------------------------------------------------------
# Kernel: one TM-row tile of the batch through the fused MLP + log_softmax
# -----------------------------------------------------------------------------
def ffnn_kernel(x_ref, w1_ref, b1_ref, w2_ref, b2_ref, w3_ref, b3_ref, o_ref):
    x = x_ref[...]                                                    # (TM, IN_PAD) bf16

    # h1 = relu(x @ W1 + b1)   -- bf16 MXU, f32 accumulate
    h1 = jnp.dot(x, w1_ref[...], preferred_element_type=jnp.float32) + b1_ref[...]
    h1 = jnp.maximum(h1, 0.0).astype(jnp.bfloat16)                    # (TM, H1_PAD)

    # h2 = relu(h1 @ W2 + b2)
    h2 = jnp.dot(h1, w2_ref[...], preferred_element_type=jnp.float32) + b2_ref[...]
    h2 = jnp.maximum(h2, 0.0).astype(jnp.bfloat16)                    # (TM, H2_PAD)

    # logits = h2 @ W3 + b3.  Padded class lanes already carry NEG_BIG via b3,
    # so no iota/where masking is needed before the softmax.
    logits = jnp.dot(h2, w3_ref[...], preferred_element_type=jnp.float32) + b3_ref[...]

    # log_softmax over the class axis (f32); padded lanes contribute exp() == 0.
    m = jnp.max(logits, axis=-1, keepdims=True)
    shifted = logits - m
    lse = jnp.log(jnp.sum(jnp.exp(shifted), axis=-1, keepdims=True))
    o_ref[...] = shifted - lse                                        # (TM, C_PAD)


# -----------------------------------------------------------------------------
# Host-side parameter padding (done once) and the batched forward wrapper
# -----------------------------------------------------------------------------
def prepare_params(w1, b1, w2, b2, w3, b3):
    """Zero-pad to TPU-aligned shapes; weights -> bf16, biases -> f32 (1, N).

    Weights are expected pre-transposed to (in_features, out_features).
    The padded class lanes of b3 are filled with NEG_BIG so the kernel's
    log_softmax ignores them without any in-kernel masking.
    """
    w1p = jnp.zeros((IN_PAD, H1_PAD), jnp.bfloat16)
    w1p = w1p.at[:INPUT_SIZE, :HIDDEN_1].set(w1.astype(jnp.bfloat16))
    b1p = jnp.zeros((1, H1_PAD), jnp.float32).at[0, :HIDDEN_1].set(b1.reshape(-1))

    w2p = jnp.zeros((H1_PAD, H2_PAD), jnp.bfloat16)
    w2p = w2p.at[:HIDDEN_1, :HIDDEN_2].set(w2.astype(jnp.bfloat16))
    b2p = jnp.zeros((1, H2_PAD), jnp.float32).at[0, :HIDDEN_2].set(b2.reshape(-1))

    w3p = jnp.zeros((H2_PAD, C_PAD), jnp.bfloat16)
    w3p = w3p.at[:HIDDEN_2, :N_CLASSES].set(w3.astype(jnp.bfloat16))
    b3p = jnp.full((1, C_PAD), NEG_BIG, jnp.float32)
    b3p = b3p.at[0, :N_CLASSES].set(b3.reshape(-1))
    return w1p, b1p, w2p, b2p, w3p, b3p


@functools.partial(jax.jit, static_argnames=("tm",))
def _ffnn_padded(x_pad, w1p, b1p, w2p, b2p, w3p, b3p, *, tm):
    b_pad = x_pad.shape[0]
    return pl.pallas_call(
        ffnn_kernel,
        out_shape=jax.ShapeDtypeStruct((b_pad, C_PAD), jnp.float32),
        grid=(b_pad // tm,),
        in_specs=[
            pl.BlockSpec((tm, IN_PAD), lambda i: (i, 0)),       # x: one tile per step
            pl.BlockSpec((IN_PAD, H1_PAD), lambda i: (0, 0)),   # W1: VMEM-resident
            pl.BlockSpec((1, H1_PAD), lambda i: (0, 0)),        # b1
            pl.BlockSpec((H1_PAD, H2_PAD), lambda i: (0, 0)),   # W2
            pl.BlockSpec((1, H2_PAD), lambda i: (0, 0)),        # b2
            pl.BlockSpec((H2_PAD, C_PAD), lambda i: (0, 0)),    # W3
            pl.BlockSpec((1, C_PAD), lambda i: (0, 0)),         # b3
        ],
        out_specs=pl.BlockSpec((tm, C_PAD), lambda i: (i, 0)),  # lane-dense output
        compiler_params=pltpu.CompilerParams(
            dimension_semantics=("parallel",)),
    )(x_pad, w1p, b1p, w2p, b2p, w3p, b3p)


def ffnn_forward(x, params, *, tm=None):
    """x: (B, INPUT_SIZE) or (INPUT_SIZE,) f32 -> (B, N_CLASSES) log-probs."""
    if x.ndim == 1:
        x = x[None, :]
    batch = x.shape[0]
    if tm is None:
        # Don't pad a tiny batch up to a full 128/256-row tile.
        tm = min(_pick_tm(), _round_up(batch, 8))
    b_pad = _round_up(batch, tm)
    x_pad = jnp.zeros((b_pad, IN_PAD), jnp.bfloat16)
    x_pad = x_pad.at[:batch, :INPUT_SIZE].set(x.astype(jnp.bfloat16))
    out = _ffnn_padded(x_pad, *params, tm=tm)
    return out[:batch, :N_CLASSES]


# -----------------------------------------------------------------------------
# Initialization (matches torch.nn.Linear's U(-1/sqrt(in), 1/sqrt(in))),
# weights pre-transposed to (in_features, out_features).
# -----------------------------------------------------------------------------
def init_linear(key, in_features, out_features):
    kw, kb = jax.random.split(key)
    bound = 1.0 / jnp.sqrt(float(in_features))
    w = jax.random.uniform(kw, (in_features, out_features), jnp.float32,
                           minval=-bound, maxval=bound)
    b = jax.random.uniform(kb, (out_features,), jnp.float32,
                           minval=-bound, maxval=bound)
    return w, b


if __name__ == "__main__":
    key = jax.random.PRNGKey(0)
    k_x, k1, k2, k3 = jax.random.split(key, 4)

    BATCH = 8  # small demo batch; the kernel pads rows up to the TM tile
    x = jax.random.normal(k_x, (BATCH, INPUT_SIZE), jnp.float32)

    w1, b1 = init_linear(k1, INPUT_SIZE, HIDDEN_1)
    w2, b2 = init_linear(k2, HIDDEN_1, HIDDEN_2)
    w3, b3 = init_linear(k3, HIDDEN_2, N_CLASSES)
    params = prepare_params(w1, b1, w2, b2, w3, b3)

    out = ffnn_forward(x, params)
    out = jax.block_until_ready(out)
    assert out.shape == (BATCH, N_CLASSES)

    # Pure-JAX f32 reference of the same math (per-row log_softmax over classes).
    h1 = jnp.maximum(x @ w1 + b1, 0.0)
    h2 = jnp.maximum(h1 @ w2 + b2, 0.0)
    logits = h2 @ w3 + b3
    ref = jax.nn.log_softmax(logits, axis=-1)

    # bf16 weights/activations in the kernel -> loose absolute tolerance vs f32.
    assert jnp.allclose(out, ref, atol=5e-2), "mismatch vs f32 reference"
    # Rows must be valid log-probabilities.
    assert jnp.allclose(jnp.sum(jnp.exp(out), axis=-1), 1.0, atol=1e-3)

    # Single-example path: matches the original module's `output[None, :]`.
    out1 = jax.block_until_ready(ffnn_forward(x[0], params))
    assert out1.shape == (1, N_CLASSES)
    assert jnp.allclose(out1[0], out[0], atol=1e-5)

    print("KERNEL_OK")
</pallas_src>

<mosaic_0001>
module attributes {stable_mosaic.version = 11 : i64} {
  func.func @ffnn_kernel(%arg0: i32, %arg1: memref<8x512xbf16, #tpu.memory_space<vmem>>, %arg2: memref<512x128xbf16, #tpu.memory_space<vmem>>, %arg3: memref<1x128xf32, #tpu.memory_space<vmem>>, %arg4: memref<128x128xbf16, #tpu.memory_space<vmem>>, %arg5: memref<1x128xf32, #tpu.memory_space<vmem>>, %arg6: memref<128x128xbf16, #tpu.memory_space<vmem>>, %arg7: memref<1x128xf32, #tpu.memory_space<vmem>>, %arg8: memref<8x128xf32, #tpu.memory_space<vmem>>) attributes {dimension_semantics = [#tpu.dimension_semantics<parallel>], iteration_bounds = array<i64: 1>, scalar_prefetch = 0 : i64, scratch_operands = 0 : i64, tpu.core_type = #tpu.core_type<tc>, window_params = [{transform_indices = @transform_0, window_bounds = array<i64: 8, 512>}, {pipeline_mode = #tpu.pipeline_mode<synchronous>, transform_indices = @transform_1, window_bounds = array<i64: 512, 128>}, {pipeline_mode = #tpu.pipeline_mode<synchronous>, transform_indices = @transform_2, window_bounds = array<i64: 1, 128>}, {pipeline_mode = #tpu.pipeline_mode<synchronous>, transform_indices = @transform_3, window_bounds = array<i64: 128, 128>}, {pipeline_mode = #tpu.pipeline_mode<synchronous>, transform_indices = @transform_4, window_bounds = array<i64: 1, 128>}, {pipeline_mode = #tpu.pipeline_mode<synchronous>, transform_indices = @transform_5, window_bounds = array<i64: 128, 128>}, {pipeline_mode = #tpu.pipeline_mode<synchronous>, transform_indices = @transform_6, window_bounds = array<i64: 1, 128>}, {transform_indices = @transform_7, window_bounds = array<i64: 8, 128>}]} {
    %c0 = arith.constant 0 : index
    %c0_0 = arith.constant 0 : index
    %0 = vector.load %arg1[%c0, %c0_0] : memref<8x512xbf16, #tpu.memory_space<vmem>>, vector<8x512xbf16>
    %c0_1 = arith.constant 0 : index
    %c0_2 = arith.constant 0 : index
    %1 = vector.load %arg2[%c0_1, %c0_2] : memref<512x128xbf16, #tpu.memory_space<vmem>>, vector<512x128xbf16>
    %cst = arith.constant dense<0.000000e+00> : vector<8x128xf32>
    %2 = tpu.matmul %0, %1, %cst {dimension_numbers = #tpu.dot_dimension_numbers<[1], [0], [0], [1], [0, 0, 1, 1], [], []>} : vector<8x512xbf16>, vector<512x128xbf16>, vector<8x128xf32> -> vector<8x128xf32>
    %c0_3 = arith.constant 0 : index
    %c0_4 = arith.constant 0 : index
    %3 = vector.load %arg3[%c0_3, %c0_4] : memref<1x128xf32, #tpu.memory_space<vmem>>, vector<1x128xf32>
    %4 = vector.broadcast %3 : vector<1x128xf32> to vector<8x128xf32>
    %5 = arith.addf %2, %4 : vector<8x128xf32>
    %cst_5 = arith.constant 0.000000e+00 : f32
    %6 = vector.broadcast %cst_5 : f32 to vector<8x128xf32>
    %7 = arith.maximumf %5, %6 : vector<8x128xf32>
    %8 = arith.truncf %7 : vector<8x128xf32> to vector<8x128xbf16>
    %c0_6 = arith.constant 0 : index
    %c0_7 = arith.constant 0 : index
    %9 = vector.load %arg4[%c0_6, %c0_7] : memref<128x128xbf16, #tpu.memory_space<vmem>>, vector<128x128xbf16>
    %cst_8 = arith.constant dense<0.000000e+00> : vector<8x128xf32>
    %10 = tpu.matmul %8, %9, %cst_8 {dimension_numbers = #tpu.dot_dimension_numbers<[1], [0], [0], [1], [0, 0, 1, 1], [], []>} : vector<8x128xbf16>, vector<128x128xbf16>, vector<8x128xf32> -> vector<8x128xf32>
    %c0_9 = arith.constant 0 : index
    %c0_10 = arith.constant 0 : index
    %11 = vector.load %arg5[%c0_9, %c0_10] : memref<1x128xf32, #tpu.memory_space<vmem>>, vector<1x128xf32>
    %12 = vector.broadcast %11 : vector<1x128xf32> to vector<8x128xf32>
    %13 = arith.addf %10, %12 : vector<8x128xf32>
    %cst_11 = arith.constant 0.000000e+00 : f32
    %14 = vector.broadcast %cst_11 : f32 to vector<8x128xf32>
    %15 = arith.maximumf %13, %14 : vector<8x128xf32>
    %16 = arith.truncf %15 : vector<8x128xf32> to vector<8x128xbf16>
    %c0_12 = arith.constant 0 : index
    %c0_13 = arith.constant 0 : index
    %17 = vector.load %arg6[%c0_12, %c0_13] : memref<128x128xbf16, #tpu.memory_space<vmem>>, vector<128x128xbf16>
    %cst_14 = arith.constant dense<0.000000e+00> : vector<8x128xf32>
    %18 = tpu.matmul %16, %17, %cst_14 {dimension_numbers = #tpu.dot_dimension_numbers<[1], [0], [0], [1], [0, 0, 1, 1], [], []>} : vector<8x128xbf16>, vector<128x128xbf16>, vector<8x128xf32> -> vector<8x128xf32>
    %c0_15 = arith.constant 0 : index
    %c0_16 = arith.constant 0 : index
    %19 = vector.load %arg7[%c0_15, %c0_16] : memref<1x128xf32, #tpu.memory_space<vmem>>, vector<1x128xf32>
    %20 = vector.broadcast %19 : vector<1x128xf32> to vector<8x128xf32>
    %21 = arith.addf %18, %20 : vector<8x128xf32>
    %cst_17 = arith.constant dense<0xFF800000> : vector<8xf32>
    %22 = vector.multi_reduction <maximumf>, %21, %cst_17 [1] : vector<8x128xf32> to vector<8xf32>
    %23 = vector.shape_cast %22 : vector<8xf32> to vector<8x1xf32>
    %24 = vector.broadcast %23 : vector<8x1xf32> to vector<8x128xf32>
    %25 = arith.subf %21, %24 : vector<8x128xf32>
    %26 = math.exp %25 : vector<8x128xf32>
    %cst_18 = arith.constant dense<0.000000e+00> : vector<8xf32>
    %27 = vector.multi_reduction <add>, %26, %cst_18 [1] : vector<8x128xf32> to vector<8xf32>
    %28 = vector.shape_cast %27 : vector<8xf32> to vector<8x1xf32>
    %29 = math.log %28 : vector<8x1xf32>
    %30 = vector.broadcast %29 : vector<8x1xf32> to vector<8x128xf32>
    %31 = arith.subf %25, %30 : vector<8x128xf32>
    %c0_19 = arith.constant 0 : index
    %c0_20 = arith.constant 0 : index
    %32 = vector.load %arg8[%c0_19, %c0_20] : memref<8x128xf32, #tpu.memory_space<vmem>>, vector<8x128xf32>
    tpu.vector_store %arg8[%c0_19, %c0_20], %31 {strides = array<i32>} : memref<8x128xf32, #tpu.memory_space<vmem>>, vector<8x128xf32>,
    return
  }
  func.func @transform_0(%arg0: i32) -> (i32, i32) {
    %c0_i32 = arith.constant 0 : i32
    %c0_i32_0 = arith.constant 0 : i32
    return %arg0, %c0_i32 : i32, i32
  }
  func.func @transform_1(%arg0: i32) -> (i32, i32) {
    %c0_i32 = arith.constant 0 : i32
    %c0_i32_0 = arith.constant 0 : i32
    %c0_i32_1 = arith.constant 0 : i32
    return %c0_i32, %c0_i32_0 : i32, i32
  }
  func.func @transform_2(%arg0: i32) -> (i32, i32) {
    %c0_i32 = arith.constant 0 : i32
    %c0_i32_0 = arith.constant 0 : i32
    %c0_i32_1 = arith.constant 0 : i32
    return %c0_i32, %c0_i32_0 : i32, i32
  }
  func.func @transform_3(%arg0: i32) -> (i32, i32) {
    %c0_i32 = arith.constant 0 : i32
    %c0_i32_0 = arith.constant 0 : i32
    %c0_i32_1 = arith.constant 0 : i32
    return %c0_i32, %c0_i32_0 : i32, i32
  }
  func.func @transform_4(%arg0: i32) -> (i32, i32) {
    %c0_i32 = arith.constant 0 : i32
    %c0_i32_0 = arith.constant 0 : i32
    %c0_i32_1 = arith.constant 0 : i32
    return %c0_i32, %c0_i32_0 : i32, i32
  }
  func.func @transform_5(%arg0: i32) -> (i32, i32) {
    %c0_i32 = arith.constant 0 : i32
    %c0_i32_0 = arith.constant 0 : i32
    %c0_i32_1 = arith.constant 0 : i32
    return %c0_i32, %c0_i32_0 : i32, i32
  }
  func.func @transform_6(%arg0: i32) -> (i32, i32) {
    %c0_i32 = arith.constant 0 : i32
    %c0_i32_0 = arith.constant 0 : i32
    %c0_i32_1 = arith.constant 0 : i32
    return %c0_i32, %c0_i32_0 : i32, i32
  }
  func.func @transform_7(%arg0: i32) -> (i32, i32) {
    %c0_i32 = arith.constant 0 : i32
    %c0_i32_0 = arith.constant 0 : i32
    return %arg0, %c0_i32 : i32, i32
  }
}

</mosaic_0001>

<llo_original>
// kernel: _ffnn_padded.1
$region0: #{_ffnn_padded.1}
  #allocation0 [shape = 'u32[]', space=smem, size = 0x4, offset = 0x4, fixed_abs, tag = 'smem constant byte address 0x4 - core index']
  #allocation1 [shape = 'u32[144,128]{1,0:T(1,128)}', space=vmem, size = 0x12000, scoped, tag = 'internal scratch']
  %s0 = inlined_call_operand.hbm [shape: bf16[8,512], index: 0, kind: input, shape index: {}]
  %s1 = inlined_call_operand.hbm [shape: bf16[512,128], index: 1, kind: input, shape index: {}]
  %s2 = inlined_call_operand.vmem [shape: f32[1,128], index: 2, kind: input, shape index: {}]
  %s3 = inlined_call_operand.hbm [shape: bf16[128,128], index: 3, kind: input, shape index: {}]
  %s4 = inlined_call_operand.vmem [shape: f32[1,128], index: 4, kind: input, shape index: {}]
  %s5 = inlined_call_operand.hbm [shape: bf16[128,128], index: 5, kind: input, shape index: {}]
  %s6 = inlined_call_operand.vmem [shape: f32[1,128], index: 6, kind: input, shape index: {}]
  %s7 = inlined_call_operand.hbm [shape: f32[8,128], index: 7, kind: output, shape index: {}]
  %s8 = sld [smem:[#allocation0]]
  $region54: #{_ffnn_padded.1} parent=0
    _
  %s10 = ssub.s32 1, %s8
  %s11 = scalar_select 0, %s10, %s8
  $region1: #{_ffnn_padded.1} parent=0
    #allocation2 [shape = 'u8[8192]{0}', space=vmem, size = 0x2000, scoped, tag = 'input window, operand 0, single buffered']
    #allocation3 [shape = 's32[1]{0}', space=sflag, size = 0x4, scoped, tag = 'scoped memory for _ffnn_padded.1']
    #allocation4 [shape = 's32[1]{0}', space=sflag, size = 0x4, scoped, tag = 'scoped memory for _ffnn_padded.1']
    #allocation5 [shape = 'u8[131072]{0}', space=vmem, size = 0x20000, scoped, tag = 'input window, operand 1, single buffered']
    #allocation6 [shape = 's32[1]{0}', space=sflag, size = 0x4, scoped, tag = 'scoped memory for _ffnn_padded.1']
    #allocation7 [shape = 'u8[32768]{0}', space=vmem, size = 0x8000, scoped, tag = 'input window, operand 3, single buffered']
    #allocation8 [shape = 'u8[32768]{0}', space=vmem, size = 0x8000, scoped, tag = 'input window, operand 5, single buffered']
    #allocation9 [shape = 's32[1]{0}', space=sflag, size = 0x4, scoped, tag = 'scoped memory for _ffnn_padded.1']
    #allocation10 [shape = 'u8[4096]{0}', space=vmem, size = 0x1000, scoped, tag = 'output window, operand 0, single buffered']
    %12 = vsyncpa [#allocation3], 0
    %13 = vsyncpa [#allocation6], 0
    %14 = vsyncpa [#allocation9], 0
    %15 = vsyncpa [#allocation4], 0
    // Predicated region
    $region2: #{_ffnn_padded.1} parent=1 // pred_check
      _
    $region3: #{_ffnn_padded.1} parent=1 // pred_check_branch
      %17 = sbr.rel (0) target = $region5
    $region4: #{_ffnn_padded.1} parent=1 // pred_region
      %s19 = ssub.s32 256, 256
      %20 = vsyncadd [#allocation3], %s19
      %s22 = sshll.u32 [#allocation2], 4
      %s23 = int_to_ptr.vmem [resolvable:$true] %s22
      %25 = dma.hbm_to_vmem [thread:$0]  %s0, 256, %s23, [#allocation3]
    $region5: #{_ffnn_padded.1} parent=1 // pred_fallthru
      _
    // Predicated region
    $region6: #{_ffnn_padded.1} parent=1 // pred_check
      _
    $region7: #{_ffnn_padded.1} parent=1 // pred_check_branch
      %27 = sbr.rel (0) target = $region9
    $region8: #{_ffnn_padded.1} parent=1 // pred_region
      %s29 = ssub.s32 4096, 4096
      %30 = vsyncadd [#allocation6], %s29
      %s31 = sshll.u32 [#allocation5], 4
      %s32 = int_to_ptr.vmem [resolvable:$true] %s31
      %37 = dma.hbm_to_vmem [thread:$0]  %s1, 4096, %s32, [#allocation6], 64, 64, 4
    $region9: #{_ffnn_padded.1} parent=1 // pred_fallthru
      _
    // Predicated region
    $region10: #{_ffnn_padded.1} parent=1 // pred_check
      _
    $region11: #{_ffnn_padded.1} parent=1 // pred_check_branch
      %39 = sbr.rel (0) target = $region13
    $region12: #{_ffnn_padded.1} parent=1 // pred_region
      _
    $region13: #{_ffnn_padded.1} parent=1 // pred_fallthru
      _
    // Predicated region
    $region14: #{_ffnn_padded.1} parent=1 // pred_check
      _
    $region15: #{_ffnn_padded.1} parent=1 // pred_check_branch
      %41 = sbr.rel (0) target = $region17
    $region16: #{_ffnn_padded.1} parent=1 // pred_region
      %s43 = ssub.s32 1024, 1024
      %44 = vsyncadd [#allocation6], %s43
      %s45 = sshll.u32 [#allocation7], 4
      %s46 = int_to_ptr.vmem [resolvable:$true] %s45
      %51 = dma.hbm_to_vmem [thread:$0]  %s3, 1024, %s46, [#allocation6], 64, 64, 4
    $region17: #{_ffnn_padded.1} parent=1 // pred_fallthru
      _
    // Predicated region
    $region18: #{_ffnn_padded.1} parent=1 // pred_check
      _
    $region19: #{_ffnn_padded.1} parent=1 // pred_check_branch
      %53 = sbr.rel (0) target = $region21
    $region20: #{_ffnn_padded.1} parent=1 // pred_region
      _
    $region21: #{_ffnn_padded.1} parent=1 // pred_fallthru
      _
    // Predicated region
    $region22: #{_ffnn_padded.1} parent=1 // pred_check
      _
    $region23: #{_ffnn_padded.1} parent=1 // pred_check_branch
      %55 = sbr.rel (0) target = $region25
    $region24: #{_ffnn_padded.1} parent=1 // pred_region
      %s57 = ssub.s32 1024, 1024
      %58 = vsyncadd [#allocation9], %s57
      %s59 = sshll.u32 [#allocation8], 4
      %s60 = int_to_ptr.vmem [resolvable:$true] %s59
      %65 = dma.hbm_to_vmem [thread:$0]  %s5, 1024, %s60, [#allocation9], 64, 64, 4
    $region25: #{_ffnn_padded.1} parent=1 // pred_fallthru
      _
    // Predicated region
    $region26: #{_ffnn_padded.1} parent=1 // pred_check
      _
    $region27: #{_ffnn_padded.1} parent=1 // pred_check_branch
      %67 = sbr.rel (0) target = $region29
    $region28: #{_ffnn_padded.1} parent=1 // pred_region
      _
    $region29: #{_ffnn_padded.1} parent=1 // pred_fallthru
      _
    // Predicated region
    $region30: #{_ffnn_padded.1} parent=1 // pred_check
      _
    $region31: #{_ffnn_padded.1} parent=1 // pred_check_branch
      %69 = sbr.rel (0) target = $region33
    $region32: #{_ffnn_padded.1} parent=1 // pred_region
      %70 = dma.done [#allocation3], 256
    $region33: #{_ffnn_padded.1} parent=1 // pred_fallthru
      _
    // Predicated region
    $region34: #{_ffnn_padded.1} parent=1 // pred_check
      _
    $region35: #{_ffnn_padded.1} parent=1 // pred_check_branch
      %72 = sbr.rel (0) target = $region37
    $region36: #{_ffnn_padded.1} parent=1 // pred_region
      %73 = dma.done [#allocation6], 4096
    $region37: #{_ffnn_padded.1} parent=1 // pred_fallthru
      _
    // Predicated region
    $region38: #{_ffnn_padded.1} parent=1 // pred_check
      _
    $region39: #{_ffnn_padded.1} parent=1 // pred_check_branch
      %75 = sbr.rel (0) target = $region41
    $region40: #{_ffnn_padded.1} parent=1 // pred_region
      %76 = dma.done [#allocation6], 1024
    $region41: #{_ffnn_padded.1} parent=1 // pred_fallthru
      _
    // Predicated region
    $region42: #{_ffnn_padded.1} parent=1 // pred_check
      _
    $region43: #{_ffnn_padded.1} parent=1 // pred_check_branch
      %78 = sbr.rel (0) target = $region45
    $region44: #{_ffnn_padded.1} parent=1 // pred_region
      %79 = dma.done [#allocation9], 1024
    $region45: #{_ffnn_padded.1} parent=1 // pred_fallthru
      _
    %v81 = vld [vmem:[#allocation2] sm:$0xff]
    %v82 = vld [vmem:[#allocation2 + $0x8] sm:$0xff]
    %v83 = vld [vmem:[#allocation5] sm:$0xf]
    %v84 = vld [vmem:[#allocation5 + $0x4] sm:$0xf]
    %v85 = vld [vmem:[#allocation5 + $0x8] sm:$0xf]
    %v86 = vld [vmem:[#allocation5 + $0xc] sm:$0xf]
    %v87 = vld [vmem:[#allocation5 + $0x10] sm:$0xf]
    %v88 = vld [vmem:[#allocation5 + $0x14] sm:$0xf]
    %v89 = vld [vmem:[#allocation5 + $0x18] sm:$0xf]
    %v90 = vld [vmem:[#allocation5 + $0x1c] sm:$0xf]
    %v91 = vld [vmem:[#allocation5 + $0x20] sm:$0xf]
    %v92 = vld [vmem:[#allocation5 + $0x24] sm:$0xf]
    %v93 = vld [vmem:[#allocation5 + $0x28] sm:$0xf]
    %v94 = vld [vmem:[#allocation5 + $0x2c] sm:$0xf]
    %v95 = vld [vmem:[#allocation5 + $0x30] sm:$0xf]
    %v96 = vld [vmem:[#allocation5 + $0x34] sm:$0xf]
    %v97 = vld [vmem:[#allocation5 + $0x38] sm:$0xf]
    %v98 = vld [vmem:[#allocation5 + $0x3c] sm:$0xf]
    %v99 = vld [vmem:[#allocation5 + $0x40] sm:$0xf]
    %v100 = vld [vmem:[#allocation5 + $0x44] sm:$0xf]
    %v101 = vld [vmem:[#allocation5 + $0x48] sm:$0xf]
    %v102 = vld [vmem:[#allocation5 + $0x4c] sm:$0xf]
    %v103 = vld [vmem:[#allocation5 + $0x50] sm:$0xf]
    %v104 = vld [vmem:[#allocation5 + $0x54] sm:$0xf]
    %v105 = vld [vmem:[#allocation5 + $0x58] sm:$0xf]
    %v106 = vld [vmem:[#allocation5 + $0x5c] sm:$0xf]
    %v107 = vld [vmem:[#allocation5 + $0x60] sm:$0xf]
    %v108 = vld [vmem:[#allocation5 + $0x64] sm:$0xf]
    %v109 = vld [vmem:[#allocation5 + $0x68] sm:$0xf]
    %v110 = vld [vmem:[#allocation5 + $0x6c] sm:$0xf]
    %v111 = vld [vmem:[#allocation5 + $0x70] sm:$0xf]
    %v112 = vld [vmem:[#allocation5 + $0x74] sm:$0xf]
    %v113 = vld [vmem:[#allocation5 + $0x78] sm:$0xf]
    %v114 = vld [vmem:[#allocation5 + $0x7c] sm:$0xf]
    %v115 = vld [vmem:[#allocation5 + $0x80] sm:$0xf]
    %v116 = vld [vmem:[#allocation5 + $0x84] sm:$0xf]
    %v117 = vld [vmem:[#allocation5 + $0x88] sm:$0xf]
    %v118 = vld [vmem:[#allocation5 + $0x8c] sm:$0xf]
    %v119 = vld [vmem:[#allocation5 + $0x90] sm:$0xf]
    %v120 = vld [vmem:[#allocation5 + $0x94] sm:$0xf]
    %v121 = vld [vmem:[#allocation5 + $0x98] sm:$0xf]
    %v122 = vld [vmem:[#allocation5 + $0x9c] sm:$0xf]
    %v123 = vld [vmem:[#allocation5 + $0xa0] sm:$0xf]
    %v124 = vld [vmem:[#allocation5 + $0xa4] sm:$0xf]
    %v125 = vld [vmem:[#allocation5 + $0xa8] sm:$0xf]
    %v126 = vld [vmem:[#allocation5 + $0xac] sm:$0xf]
    %v127 = vld [vmem:[#allocation5 + $0xb0] sm:$0xf]
    %v128 = vld [vmem:[#allocation5 + $0xb4] sm:$0xf]
    %v129 = vld [vmem:[#allocation5 + $0xb8] sm:$0xf]
    %v130 = vld [vmem:[#allocation5 + $0xbc] sm:$0xf]
    %v131 = vld [vmem:[#allocation5 + $0xc0] sm:$0xf]
    %v132 = vld [vmem:[#allocation5 + $0xc4] sm:$0xf]
    %v133 = vld [vmem:[#allocation5 + $0xc8] sm:$0xf]
    %v134 = vld [vmem:[#allocation5 + $0xcc] sm:$0xf]
    %v135 = vld [vmem:[#allocation5 + $0xd0] sm:$0xf]
    %v136 = vld [vmem:[#allocation5 + $0xd4] sm:$0xf]
    %v137 = vld [vmem:[#allocation5 + $0xd8] sm:$0xf]
    %v138 = vld [vmem:[#allocation5 + $0xdc] sm:$0xf]
    %v139 = vld [vmem:[#allocation5 + $0xe0] sm:$0xf]
    %v140 = vld [vmem:[#allocation5 + $0xe4] sm:$0xf]
    %v141 = vld [vmem:[#allocation5 + $0xe8] sm:$0xf]
    %v142 = vld [vmem:[#allocation5 + $0xec] sm:$0xf]
    %v143 = vld [vmem:[#allocation5 + $0xf0] sm:$0xf]
    %v144 = vld [vmem:[#allocation5 + $0xf4] sm:$0xf]
    %v145 = vld [vmem:[#allocation5 + $0xf8] sm:$0xf]
    %v146 = vld [vmem:[#allocation5 + $0xfc] sm:$0xf]
    %v147 = vld [vmem:[%s2] sm:$0x1]
    %v149 = vlaneseq
    %v150 = vshrl.u32 %v149, 7
    %v151 = vsub.s32 0, %v150
    %v152 = vrot.slane %v147, %v151
    %v156 = vunpack.c.l.b16 %v81
    %v157 = vunpack.c.h.b16 %v81
    %v158 = vunpack.c.l.b16 %v82
    %v159 = vunpack.c.h.b16 %v82
    %v160 = vpack.c.b16 %v156, %v156
    %v161 = vpack.c.b16 %v157, %v157
    %v162 = vpack.c.b16 %v158, %v158
    %v163 = vpack.c.b16 %v159, %v159
    %v232 = vunpack.c.l.b16 %v83
    %v233 = vunpack.c.l.b16 %v84
    %v234 = vunpack.c.l.b16 %v85
    %v235 = vunpack.c.l.b16 %v86
    %v236 = vunpack.c.l.b16 %v87
    %v237 = vunpack.c.l.b16 %v88
    %v238 = vunpack.c.l.b16 %v89
    %v239 = vunpack.c.l.b16 %v90
    %v240 = vunpack.c.l.b16 %v91
    %v241 = vunpack.c.l.b16 %v92
    %v242 = vunpack.c.l.b16 %v93
    %v243 = vunpack.c.l.b16 %v94
    %v244 = vunpack.c.l.b16 %v95
    %v245 = vunpack.c.l.b16 %v96
    %v246 = vunpack.c.l.b16 %v97
    %v247 = vunpack.c.l.b16 %v98
    %v248 = vunpack.c.l.b16 %v99
    %v249 = vunpack.c.l.b16 %v100
    %v250 = vunpack.c.l.b16 %v101
    %v251 = vunpack.c.l.b16 %v102
    %v252 = vunpack.c.l.b16 %v103
    %v253 = vunpack.c.l.b16 %v104
    %v254 = vunpack.c.l.b16 %v105
    %v255 = vunpack.c.l.b16 %v106
    %v256 = vunpack.c.l.b16 %v107
    %v257 = vunpack.c.l.b16 %v108
    %v258 = vunpack.c.l.b16 %v109
    %v259 = vunpack.c.l.b16 %v110
    %v260 = vunpack.c.l.b16 %v111
    %v261 = vunpack.c.l.b16 %v112
    %v262 = vunpack.c.l.b16 %v113
    %v263 = vunpack.c.l.b16 %v114
    %v264 = vunpack.c.l.b16 %v115
    %v265 = vunpack.c.l.b16 %v116
    %v266 = vunpack.c.l.b16 %v117
    %v267 = vunpack.c.l.b16 %v118
    %v268 = vunpack.c.l.b16 %v119
    %v269 = vunpack.c.l.b16 %v120
    %v270 = vunpack.c.l.b16 %v121
    %v271 = vunpack.c.l.b16 %v122
    %v272 = vunpack.c.l.b16 %v123
    %v273 = vunpack.c.l.b16 %v124
    %v274 = vunpack.c.l.b16 %v125
    %v275 = vunpack.c.l.b16 %v126
    %v276 = vunpack.c.l.b16 %v127
    %v277 = vunpack.c.l.b16 %v128
    %v278 = vunpack.c.l.b16 %v129
    %v279 = vunpack.c.l.b16 %v130
    %v280 = vunpack.c.l.b16 %v131
    %v281 = vunpack.c.l.b16 %v132
    %v282 = vunpack.c.l.b16 %v133
    %v283 = vunpack.c.l.b16 %v134
    %v284 = vunpack.c.l.b16 %v135
    %v285 = vunpack.c.l.b16 %v136
    %v286 = vunpack.c.l.b16 %v137
    %v287 = vunpack.c.l.b16 %v138
    %v288 = vunpack.c.l.b16 %v139
    %v289 = vunpack.c.l.b16 %v140
    %v290 = vunpack.c.l.b16 %v141
    %v291 = vunpack.c.l.b16 %v142
    %v292 = vunpack.c.l.b16 %v143
    %v293 = vunpack.c.l.b16 %v144
    %v294 = vunpack.c.l.b16 %v145
    %v295 = vunpack.c.l.b16 %v146
    %v296 = vpack.c.b16 %v233, %v232
    %v297 = vpack.c.b16 %v235, %v234
    %v298 = vpack.c.b16 %v237, %v236
    %v299 = vpack.c.b16 %v239, %v238
    %v300 = vpack.c.b16 %v241, %v240
    %v301 = vpack.c.b16 %v243, %v242
    %v302 = vpack.c.b16 %v245, %v244
    %v303 = vpack.c.b16 %v247, %v246
    %v304 = vpack.c.b16 %v249, %v248
    %v305 = vpack.c.b16 %v251, %v250
    %v306 = vpack.c.b16 %v253, %v252
    %v307 = vpack.c.b16 %v255, %v254
    %v308 = vpack.c.b16 %v257, %v256
    %v309 = vpack.c.b16 %v259, %v258
    %v310 = vpack.c.b16 %v261, %v260
    %v311 = vpack.c.b16 %v263, %v262
    %v312 = vpack.c.b16 %v265, %v264
    %v313 = vpack.c.b16 %v267, %v266
    %v314 = vpack.c.b16 %v269, %v268
    %v315 = vpack.c.b16 %v271, %v270
    %v316 = vpack.c.b16 %v273, %v272
    %v317 = vpack.c.b16 %v275, %v274
    %v318 = vpack.c.b16 %v277, %v276
    %v319 = vpack.c.b16 %v279, %v278
    %v320 = vpack.c.b16 %v281, %v280
    %v321 = vpack.c.b16 %v283, %v282
    %v322 = vpack.c.b16 %v285, %v284
    %v323 = vpack.c.b16 %v287, %v286
    %v324 = vpack.c.b16 %v289, %v288
    %v325 = vpack.c.b16 %v291, %v290
    %v326 = vpack.c.b16 %v293, %v292
    %v327 = vpack.c.b16 %v295, %v294
    %360 = vmatprep.subr.bf16.mxu0 0
    %361 = vmatpush1.bf16.msra.mxu0 %v296
    %362 = vmatprep.subr.bf16.mxu0 0
    %363 = vmatpush1.bf16.msra.mxu0 %v297
    %364 = vmatprep.subr.bf16.mxu0 0
    %365 = vmatpush1.bf16.msra.mxu0 %v298
    %366 = vmatprep.subr.bf16.mxu0 0
    %367 = vmatpush1.bf16.msra.mxu0 %v299
    %368 = vmatprep.subr.bf16.mxu0 0
    %369 = vmatpush1.bf16.msra.mxu0 %v300
    %370 = vmatprep.subr.bf16.mxu0 0
    %371 = vmatpush1.bf16.msra.mxu0 %v301
    %372 = vmatprep.subr.bf16.mxu0 0
    %373 = vmatpush1.bf16.msra.mxu0 %v302
    %374 = vmatprep.subr.bf16.mxu0 0
    %375 = vmatpush1.bf16.msra.mxu0 %v303
    %376 = vmatprep.subr.bf16.mxu0 0
    %377 = vmatpush1.bf16.msra.mxu0 %v304
    %378 = vmatprep.subr.bf16.mxu0 0
    %379 = vmatpush1.bf16.msra.mxu0 %v305
    %380 = vmatprep.subr.bf16.mxu0 0
    %381 = vmatpush1.bf16.msra.mxu0 %v306
    %382 = vmatprep.subr.bf16.mxu0 0
    %383 = vmatpush1.bf16.msra.mxu0 %v307
    %384 = vmatprep.subr.bf16.mxu0 0
    %385 = vmatpush1.bf16.msra.mxu0 %v308
    %386 = vmatprep.subr.bf16.mxu0 0
    %387 = vmatpush1.bf16.msra.mxu0 %v309
    %388 = vmatprep.subr.bf16.mxu0 0
    %389 = vmatpush1.bf16.msra.mxu0 %v310
    %390 = vmatprep.subr.bf16.mxu0 0
    %391 = vmatpush1.bf16.msra.mxu0 %v311
    %392 = vmatprep.mubr.bf16.mxu0 %v161
    %393 = vmatmul.mubr.bf16.gmra.mrb[0].mxu0 %v160
    %v394 = vpop.f32.mrb[0].mxu0
    %v395 = vadd.f32 %v152, %v394
    %v396 = vpop.f32.mrb[0].mxu0
    %v397 = vpop.f32.mrb[0].mxu0
    %v398 = vpop.f32.mrb[0].mxu0
    %399 = vdwg.mxu0
    %400 = vmatprep.subr.bf16.mxu0 0
    %401 = vmatpush1.bf16.msra.mxu0 %v312
    %402 = vmatprep.subr.bf16.mxu0 0
    %403 = vmatpush1.bf16.msra.mxu0 %v313
    %404 = vmatprep.subr.bf16.mxu0 0
    %405 = vmatpush1.bf16.msra.mxu0 %v314
    %406 = vmatprep.subr.bf16.mxu0 0
    %407 = vmatpush1.bf16.msra.mxu0 %v315
    %408 = vmatprep.subr.bf16.mxu0 0
    %409 = vmatpush1.bf16.msra.mxu0 %v316
    %410 = vmatprep.subr.bf16.mxu0 0
    %411 = vmatpush1.bf16.msra.mxu0 %v317
    %412 = vmatprep.subr.bf16.mxu0 0
    %413 = vmatpush1.bf16.msra.mxu0 %v318
    %414 = vmatprep.subr.bf16.mxu0 0
    %415 = vmatpush1.bf16.msra.mxu0 %v319
    %416 = vmatprep.subr.bf16.mxu0 0
    %417 = vmatpush1.bf16.msra.mxu0 %v320
    %418 = vmatprep.subr.bf16.mxu0 0
    %419 = vmatpush1.bf16.msra.mxu0 %v321
    %420 = vmatprep.subr.bf16.mxu0 0
    %421 = vmatpush1.bf16.msra.mxu0 %v322
    %422 = vmatprep.subr.bf16.mxu0 0
    %423 = vmatpush1.bf16.msra.mxu0 %v323
    %424 = vmatprep.subr.bf16.mxu0 0
    %425 = vmatpush1.bf16.msra.mxu0 %v324
    %426 = vmatprep.subr.bf16.mxu0 0
    %427 = vmatpush1.bf16.msra.mxu0 %v325
    %428 = vmatprep.subr.bf16.mxu0 0
    %429 = vmatpush1.bf16.msra.mxu0 %v326
    %430 = vmatprep.subr.bf16.mxu0 0
    %431 = vmatpush1.bf16.msra.mxu0 %v327
    %432 = vmatprep.mubr.bf16.mxu0 %v163
    %433 = vmatmul.mubr.bf16.gmra.mrb[0].mxu0 %v162
    %v434 = vpop.f32.mrb[0].mxu0
    %v435 = vadd.f32 %v395, %v434
    %v436 = vpop.f32.mrb[0].mxu0
    %v437 = vpop.f32.mrb[0].mxu0
    %v438 = vpop.f32.mrb[0].mxu0
    %439 = vdwg.mxu0
    %v440 = vmax.f32 %v435, 0.0
    %v441 = vpack.c.bf16 %v440, %v440
    %v442 = vld [vmem:[#allocation7] sm:$0xf]
    %v443 = vld [vmem:[#allocation7 + $0x4] sm:$0xf]
    %v444 = vld [vmem:[#allocation7 + $0x8] sm:$0xf]
    %v445 = vld [vmem:[#allocation7 + $0xc] sm:$0xf]
    %v446 = vld [vmem:[#allocation7 + $0x10] sm:$0xf]
    %v447 = vld [vmem:[#allocation7 + $0x14] sm:$0xf]
    %v448 = vld [vmem:[#allocation7 + $0x18] sm:$0xf]
    %v449 = vld [vmem:[#allocation7 + $0x1c] sm:$0xf]
    %v450 = vld [vmem:[#allocation7 + $0x20] sm:$0xf]
    %v451 = vld [vmem:[#allocation7 + $0x24] sm:$0xf]
    %v452 = vld [vmem:[#allocation7 + $0x28] sm:$0xf]
    %v453 = vld [vmem:[#allocation7 + $0x2c] sm:$0xf]
    %v454 = vld [vmem:[#allocation7 + $0x30] sm:$0xf]
    %v455 = vld [vmem:[#allocation7 + $0x34] sm:$0xf]
    %v456 = vld [vmem:[#allocation7 + $0x38] sm:$0xf]
    %v457 = vld [vmem:[#allocation7 + $0x3c] sm:$0xf]
    %v458 = vld [vmem:[%s4] sm:$0x1]
    %v460 = vlaneseq
    %v461 = vshrl.u32 %v460, 7
    %v462 = vsub.s32 0, %v461
    %v463 = vrot.slane %v458, %v462
    %v481 = vunpack.c.l.b16 %v442
    %v482 = vunpack.c.l.b16 %v443
    %v483 = vunpack.c.l.b16 %v444
    %v484 = vunpack.c.l.b16 %v445
    %v485 = vunpack.c.l.b16 %v446
    %v486 = vunpack.c.l.b16 %v447
    %v487 = vunpack.c.l.b16 %v448
    %v488 = vunpack.c.l.b16 %v449
    %v489 = vunpack.c.l.b16 %v450
    %v490 = vunpack.c.l.b16 %v451
    %v491 = vunpack.c.l.b16 %v452
    %v492 = vunpack.c.l.b16 %v453
    %v493 = vunpack.c.l.b16 %v454
    %v494 = vunpack.c.l.b16 %v455
    %v495 = vunpack.c.l.b16 %v456
    %v496 = vunpack.c.l.b16 %v457
    %v497 = vpack.c.b16 %v482, %v481
    %v498 = vpack.c.b16 %v484, %v483
    %v499 = vpack.c.b16 %v486, %v485
    %v500 = vpack.c.b16 %v488, %v487
    %v501 = vpack.c.b16 %v490, %v489
    %v502 = vpack.c.b16 %v492, %v491
    %v503 = vpack.c.b16 %v494, %v493
    %v504 = vpack.c.b16 %v496, %v495
    %513 = vmatprep.subr.bf16.mxu0 0
    %514 = vmatpush1.bf16.msra.mxu0 %v497
    %515 = vmatprep.subr.bf16.mxu0 0
    %516 = vmatpush1.bf16.msra.mxu0 %v498
    %517 = vmatprep.subr.bf16.mxu0 0
    %518 = vmatpush1.bf16.msra.mxu0 %v499
    %519 = vmatprep.subr.bf16.mxu0 0
    %520 = vmatpush1.bf16.msra.mxu0 %v500
    %521 = vmatprep.subr.bf16.mxu0 0
    %522 = vmatpush1.bf16.msra.mxu0 %v501
    %523 = vmatprep.subr.bf16.mxu0 0
    %524 = vmatpush1.bf16.msra.mxu0 %v502
    %525 = vmatprep.subr.bf16.mxu0 0
    %526 = vmatpush1.bf16.msra.mxu0 %v503
    %527 = vmatprep.subr.bf16.mxu0 0
    %528 = vmatpush1.bf16.msra.mxu0 %v504
    %529 = vmatprep.subr.bf16.mxu0 0
    %530 = vmatpush1.bf16.msra.mxu0 0
    %531 = vmatprep.subr.bf16.mxu0 0
    %532 = vmatpush1.bf16.msra.mxu0 0
    %533 = vmatprep.subr.bf16.mxu0 0
    %534 = vmatpush1.bf16.msra.mxu0 0
    %535 = vmatprep.subr.bf16.mxu0 0
    %536 = vmatpush1.bf16.msra.mxu0 0
    %537 = vmatprep.subr.bf16.mxu0 0
    %538 = vmatpush1.bf16.msra.mxu0 0
    %539 = vmatprep.subr.bf16.mxu0 0
    %540 = vmatpush1.bf16.msra.mxu0 0
    %541 = vmatprep.subr.bf16.mxu0 0
    %542 = vmatpush1.bf16.msra.mxu0 0
    %543 = vmatprep.subr.bf16.mxu0 0
    %544 = vmatpush1.bf16.msra.mxu0 0
    %545 = vmatprep.mubr.bf16.mxu0 0
    %546 = vmatmul.mubr.bf16.gmra.mrb[0].mxu0 %v441
    %v547 = vpop.f32.mrb[0].mxu0
    %v548 = vadd.f32 %v463, %v547
    %v549 = vpop.f32.mrb[0].mxu0
    %v550 = vpop.f32.mrb[0].mxu0
    %v551 = vpop.f32.mrb[0].mxu0
    %552 = vdwg.mxu0
    %v553 = vmax.f32 %v548, 0.0
    %v554 = vpack.c.bf16 %v553, %v553
    %v555 = vld [vmem:[#allocation8] sm:$0xf]
    %v556 = vld [vmem:[#allocation8 + $0x4] sm:$0xf]
    %v557 = vld [vmem:[#allocation8 + $0x8] sm:$0xf]
    %v558 = vld [vmem:[#allocation8 + $0xc] sm:$0xf]
    %v559 = vld [vmem:[#allocation8 + $0x10] sm:$0xf]
    %v560 = vld [vmem:[#allocation8 + $0x14] sm:$0xf]
    %v561 = vld [vmem:[#allocation8 + $0x18] sm:$0xf]
    %v562 = vld [vmem:[#allocation8 + $0x1c] sm:$0xf]
    %v563 = vld [vmem:[#allocation8 + $0x20] sm:$0xf]
    %v564 = vld [vmem:[#allocation8 + $0x24] sm:$0xf]
    %v565 = vld [vmem:[#allocation8 + $0x28] sm:$0xf]
    %v566 = vld [vmem:[#allocation8 + $0x2c] sm:$0xf]
    %v567 = vld [vmem:[#allocation8 + $0x30] sm:$0xf]
    %v568 = vld [vmem:[#allocation8 + $0x34] sm:$0xf]
    %v569 = vld [vmem:[#allocation8 + $0x38] sm:$0xf]
    %v570 = vld [vmem:[#allocation8 + $0x3c] sm:$0xf]
    %v571 = vld [vmem:[%s6] sm:$0x1]
    %v573 = vlaneseq
    %v574 = vshrl.u32 %v573, 7
    %v575 = vsub.s32 0, %v574
    %v576 = vrot.slane %v571, %v575
    %v594 = vunpack.c.l.b16 %v555
    %v595 = vunpack.c.l.b16 %v556
    %v596 = vunpack.c.l.b16 %v557
    %v597 = vunpack.c.l.b16 %v558
    %v598 = vunpack.c.l.b16 %v559
    %v599 = vunpack.c.l.b16 %v560
    %v600 = vunpack.c.l.b16 %v561
    %v601 = vunpack.c.l.b16 %v562
    %v602 = vunpack.c.l.b16 %v563
    %v603 = vunpack.c.l.b16 %v564
    %v604 = vunpack.c.l.b16 %v565
    %v605 = vunpack.c.l.b16 %v566
    %v606 = vunpack.c.l.b16 %v567
    %v607 = vunpack.c.l.b16 %v568
    %v608 = vunpack.c.l.b16 %v569
    %v609 = vunpack.c.l.b16 %v570
    %v610 = vpack.c.b16 %v595, %v594
    %v611 = vpack.c.b16 %v597, %v596
    %v612 = vpack.c.b16 %v599, %v598
    %v613 = vpack.c.b16 %v601, %v600
    %v614 = vpack.c.b16 %v603, %v602
    %v615 = vpack.c.b16 %v605, %v604
    %v616 = vpack.c.b16 %v607, %v606
    %v617 = vpack.c.b16 %v609, %v608
    %626 = vmatprep.subr.bf16.mxu0 0
    %627 = vmatpush1.bf16.msra.mxu0 %v610
    %628 = vmatprep.subr.bf16.mxu0 0
    %629 = vmatpush1.bf16.msra.mxu0 %v611
    %630 = vmatprep.subr.bf16.mxu0 0
    %631 = vmatpush1.bf16.msra.mxu0 %v612
    %632 = vmatprep.subr.bf16.mxu0 0
    %633 = vmatpush1.bf16.msra.mxu0 %v613
    %634 = vmatprep.subr.bf16.mxu0 0
    %635 = vmatpush1.bf16.msra.mxu0 %v614
    %636 = vmatprep.subr.bf16.mxu0 0
    %637 = vmatpush1.bf16.msra.mxu0 %v615
    %638 = vmatprep.subr.bf16.mxu0 0
    %639 = vmatpush1.bf16.msra.mxu0 %v616
    %640 = vmatprep.subr.bf16.mxu0 0
    %641 = vmatpush1.bf16.msra.mxu0 %v617
    %642 = vmatprep.subr.bf16.mxu0 0
    %643 = vmatpush1.bf16.msra.mxu0 0
    %644 = vmatprep.subr.bf16.mxu0 0
    %645 = vmatpush1.bf16.msra.mxu0 0
    %646 = vmatprep.subr.bf16.mxu0 0
    %647 = vmatpush1.bf16.msra.mxu0 0
    %648 = vmatprep.subr.bf16.mxu0 0
    %649 = vmatpush1.bf16.msra.mxu0 0
    %650 = vmatprep.subr.bf16.mxu0 0
    %651 = vmatpush1.bf16.msra.mxu0 0
    %652 = vmatprep.subr.bf16.mxu0 0
    %653 = vmatpush1.bf16.msra.mxu0 0
    %654 = vmatprep.subr.bf16.mxu0 0
    %655 = vmatpush1.bf16.msra.mxu0 0
    %656 = vmatprep.subr.bf16.mxu0 0
    %657 = vmatpush1.bf16.msra.mxu0 0
    %658 = vmatprep.mubr.bf16.mxu0 0
    %659 = vmatmul.mubr.bf16.gmra.mrb[0].mxu0 %v554
    %v660 = vpop.f32.mrb[0].mxu0
    %v661 = vadd.f32 %v576, %v660
    %v662 = vpop.f32.mrb[0].mxu0
    %v663 = vpop.f32.mrb[0].mxu0
    %v664 = vpop.f32.mrb[0].mxu0
    %665 = vdwg.mxu0
    %666 = vmax.xlane.f32.xlu0 %v661
    %v667 = vpop.xlane.xlu0 %666
    %v668 = vsub.f32 %v661, %v667
    %v669 = vmul.f32 %v668, 1.442695
    %v670 = vpow.pop %v669
    %671 = vadd.xlane.f32.xlu0 %v670
    %v672 = vpop.xlane.xlu0 %671
    %v673 = vlog2.pop %v672
    %v674 = vmul.f32 %v673, 0.6931472
    %v675 = vsub.f32 %v668, %v674
    %676 = vst [vmem:[#allocation10] sm:$0xff] %v675
    // Predicated region
    $region46: #{_ffnn_padded.1} parent=1 // pred_check
      _
    $region47: #{_ffnn_padded.1} parent=1 // pred_check_branch
      %678 = sbr.rel (0) target = $region49
    $region48: #{_ffnn_padded.1} parent=1 // pred_region
      %s680 = ssub.s32 128, 128
      %681 = vsyncadd [#allocation4], %s680
      %s683 = sshll.u32 [#allocation10], 4
      %s684 = int_to_ptr.vmem [resolvable:$true] %s683
      %686 = dma.vmem_to_hbm [thread:$0]  %s684, 128, %s7, [#allocation4]
    $region49: #{_ffnn_padded.1} parent=1 // pred_fallthru
      _
    // Predicated region
    $region50: #{_ffnn_padded.1} parent=1 // pred_check
      _
    $region51: #{_ffnn_padded.1} parent=1 // pred_check_branch
      %688 = sbr.rel (0) target = $region53
    $region52: #{_ffnn_padded.1} parent=1 // pred_region
      %689 = dma.done [#allocation4], 128
    $region53: #{_ffnn_padded.1} parent=1 // pred_fallthru
      _
    %690 = vsyncpa [#allocation3], 1
    %691 = vsyncpa [#allocation6], 1
    %692 = vsyncpa [#allocation9], 1
    %693 = vsyncpa [#allocation4], 1

</llo_original>
